<compile_context>
chip_gen: v6e
topology: v6e:2x2x1
jax: 0.10.0
libtpu: 0.0.40
codegen_flags: <defaults>
</compile_context>

<pallas_src>
import functools
import math

import jax
import jax.numpy as jnp
from jax import lax
from jax.experimental import pallas as pl
from jax.experimental.pallas import tpu as pltpu


# ----------------------------------------------------------------------------
# Tiled linear projection kernel: o = x @ w + b
# ----------------------------------------------------------------------------
def _linear_kernel(x_ref, w_ref, b_ref, o_ref, acc_ref):
    k = pl.program_id(2)

    @pl.when(k == 0)
    def _():
        acc_ref[...] = jnp.zeros_like(acc_ref)

    acc_ref[...] += jnp.dot(x_ref[...], w_ref[...],
                            preferred_element_type=jnp.float32)

    @pl.when(k == pl.num_programs(2) - 1)
    def _():
        o_ref[...] = (acc_ref[...] + b_ref[...]).astype(o_ref.dtype)


def linear(x2d, w, b, *, tm=512, tn=256, tk=512):
    """x2d: [N, Din], w: [Din, Dout] (transposed vs torch), b: [Dout]."""
    N, Din = x2d.shape
    Dout = w.shape[1]
    tm, tn, tk = min(tm, N), min(tn, Dout), min(tk, Din)
    if Din % tk:                     # keep the reduction axis exactly tiled
        tk = Din
    grid = (pl.cdiv(N, tm), pl.cdiv(Dout, tn), pl.cdiv(Din, tk))
    cost = pl.CostEstimate(
        flops=2 * N * Din * Dout,
        transcendentals=0,
        bytes_accessed=int((N * Din + Din * Dout + Dout + N * Dout)
                           * x2d.dtype.itemsize))
    return pl.pallas_call(
        _linear_kernel,
        out_shape=jax.ShapeDtypeStruct((N, Dout), x2d.dtype),
        grid=grid,
        in_specs=[
            pl.BlockSpec((tm, tk), lambda i, j, k: (i, k)),
            pl.BlockSpec((tk, tn), lambda i, j, k: (k, j)),
            pl.BlockSpec((1, tn), lambda i, j, k: (0, j)),
        ],
        out_specs=pl.BlockSpec((tm, tn), lambda i, j, k: (i, j)),
        scratch_shapes=[pltpu.VMEM((tm, tn), jnp.float32)],
        compiler_params=pltpu.CompilerParams(
            dimension_semantics=("parallel", "parallel", "arbitrary")),
        cost_estimate=cost,
    )(x2d, w, b.reshape(1, Dout))


# ----------------------------------------------------------------------------
# One-time probe: does this Mosaic build lower the batched (q,1,hd)x(q,Lk,hd)
# dot_generals used for the time-interval terms?  If not, fall back to the
# VPU multiply+reduce form (known to compile).
# ----------------------------------------------------------------------------
@functools.lru_cache(maxsize=None)
def _mxu_time_terms_supported(tq, Lk, hd, time_dtype_name):
    tdt = jnp.dtype(time_dtype_name)

    def probe_kernel(a_ref, t_ref, o_ref):
        a = a_ref[...]                                  # (tq, hd) f32
        t = t_ref[...]                                  # (tq, Lk, hd) time dtype
        s = lax.dot_general(a.astype(t.dtype)[:, None, :], t,
                            (((2,), (2,)), ((0,), (0,))),
                            preferred_element_type=jnp.float32)[:, 0, :]
        o = lax.dot_general(s.astype(t.dtype)[:, None, :], t,
                            (((2,), (1,)), ((0,), (0,))),
                            preferred_element_type=jnp.float32)[:, 0, :]
        o_ref[...] = o

    try:
        out = pl.pallas_call(
            probe_kernel,
            out_shape=jax.ShapeDtypeStruct((tq, hd), jnp.float32),
        )(jnp.ones((tq, hd), jnp.float32), jnp.ones((tq, Lk, hd), tdt))
        jax.block_until_ready(out)
        return True
    except Exception:            # older Mosaic lowering: use VPU fallback
        return False


# ----------------------------------------------------------------------------
# Time-aware scaled-dot-product attention kernel.
# grid = (batch, query-tile); all heads handled inside one grid step.
# ----------------------------------------------------------------------------
def _tisas_attn_kernel(q_ref, k_ref, v_ref, tmk_ref, tmv_ref, am_ref, pm_ref,
                       o_ref, acc_ref, *, n_heads, head_dim, scale,
                       use_mxu_time_terms):
    # q: (1, tq, D) f32 ; k/v: (1, Lk, D) f32
    # tmk/tmv: (1, tq, Lk, D) (bf16 in the default wrapper path)
    # am: (tq, Lk) int32, 1 = keep ; pm: (1, 1, Lk) int32, 1 = pad (masked)
    q2 = q_ref[0] * scale            # pre-scaled: scales both QK^T and Q*timeK
    k2 = k_ref[0]
    v2 = v_ref[0]
    tmk = tmk_ref[0]                 # (tq, Lk, D)
    tmv = tmv_ref[0]

    # Overwrite-style mask (matches the reference: a single -1e9 even when
    # both masks hit the same position). Built once, shared by all heads.
    keep = jnp.logical_and(am_ref[...] != 0, pm_ref[0] == 0)      # (tq, Lk)
    add_mask = jnp.where(keep, jnp.float32(0.0), jnp.float32(-1e9))

    for h in range(n_heads):
        sl = slice(h * head_dim, (h + 1) * head_dim)
        q_h = q2[:, sl]              # (tq, hd), f32, already scaled
        k_h = k2[:, sl]              # (Lk, hd)
        v_h = v2[:, sl]              # (Lk, hd)
        tmk_h = tmk[:, :, sl]        # (tq, Lk, hd)
        tmv_h = tmv[:, :, sl]

        # scores = scaled(Q K^T) + scaled(Q . time_K) + mask
        s = lax.dot_general(q_h, k_h, (((1,), (1,)), ((), ())),
                            preferred_element_type=jnp.float32)   # (tq, Lk)
        if use_mxu_time_terms:
            # batched (1,hd) x (hd,Lk) contraction -> no (tq,Lk,hd) f32 temp
            q_hb = q_h.astype(tmk_h.dtype)[:, None, :]            # (tq,1,hd)
            ts = lax.dot_general(q_hb, tmk_h, (((2,), (2,)), ((0,), (0,))),
                                 preferred_element_type=jnp.float32)[:, 0, :]
        else:
            ts = jnp.sum(q_h[:, None, :] * tmk_h.astype(jnp.float32), axis=-1)
        s = s + ts + add_mask

        # numerically stable softmax over keys
        s = s - jnp.max(s, axis=-1, keepdims=True)
        p = jnp.exp(s)
        p = p * pl.reciprocal(jnp.sum(p, axis=-1, keepdims=True), approx=True)
        # TODO(synk): dropout on p skipped (dropout_p = 0).

        o_h = jnp.dot(p, v_h, preferred_element_type=jnp.float32)  # (tq, hd)
        if use_mxu_time_terms:
            p_b = p.astype(tmv_h.dtype)[:, None, :]                # (tq,1,Lk)
            tv = lax.dot_general(p_b, tmv_h, (((2,), (1,)), ((0,), (0,))),
                                 preferred_element_type=jnp.float32)[:, 0, :]
        else:
            tv = jnp.sum(p[:, :, None] * tmv_h.astype(jnp.float32), axis=1)

        # Per-head store into the VMEM slab (bounds live state to one head).
        acc_ref[:, sl] = o_h + tv

    # Single lane-dense slab store: heads merged as [tq, H*hd = d_model].
    o_ref[0] = acc_ref[...].astype(o_ref.dtype)


def _choose_tq(Lq, Lk, d_model, time_itemsize, budget_bytes=16 << 20):
    """Largest query tile s.t. the two double-buffered time tiles fit budget."""
    per_row = 2 * 2 * Lk * d_model * time_itemsize   # 2 tensors x 2 buffers
    tq = int(min(Lq, max(1, budget_bytes // per_row)))
    if tq >= Lq:
        return Lq
    tq = max(8, (tq // 8) * 8)          # (8,128) layout rule for q/out/mask blocks
    while tq > 8 and Lq % tq != 0:      # keep grid exactly divisible
        tq -= 8
    if Lq % tq != 0:
        return Lq                        # no legal divisor: fall back to full Lq
    return tq


def tisas_attention(q, k, v, time_k, time_v, attn_mask, padding_mask, *,
                    n_heads, head_dim):
    """q: [B, Lq, D], k/v: [B, Lk, D], time_k/v: [B, Lq, Lk, D] (any float dtype),
    attn_mask: [Lq, Lk] int32 (1=keep), padding_mask: [B, 1, Lk] int32 (1=pad).
    Returns [B, Lq, D] with heads already merged (head-major in D)."""
    B, Lq, d_model = q.shape
    Lk = k.shape[1]
    t_isize = jnp.dtype(time_k.dtype).itemsize
    tq = _choose_tq(Lq, Lk, d_model, t_isize)
    n_q = Lq // tq

    use_mxu = _mxu_time_terms_supported(tq, Lk, head_dim,
                                        jnp.dtype(time_k.dtype).name)

    kernel = functools.partial(
        _tisas_attn_kernel, n_heads=n_heads, head_dim=head_dim,
        scale=1.0 / math.sqrt(head_dim),       # Python float -> no captured tracer
        use_mxu_time_terms=use_mxu)

    # VMEM budget estimate (double-buffered blocks + scratch); keep well under
    # v7x's 64 MiB physical, above v5e's 16 MiB default scoped limit.
    est = 2 * (tq * d_model * 4 + 2 * Lk * d_model * 4
               + 2 * tq * Lk * d_model * t_isize
               + tq * Lk * 4 + Lk * 4 + tq * d_model * 4) + tq * d_model * 4
    vmem_limit = int(min(max(32 << 20, int(est * 1.5) + (2 << 20)), 48 << 20))

    cost = pl.CostEstimate(
        flops=8 * B * Lq * Lk * d_model,            # QK, Q*tK, PV, P*tV
        transcendentals=B * n_heads * Lq * Lk,      # exp in softmax
        bytes_accessed=int(2 * B * Lq * Lk * d_model * t_isize
                           + (2 * B * Lq * d_model + 2 * B * Lk * d_model) * 4
                           + (Lq * Lk + B * Lk) * 4))

    return pl.pallas_call(
        kernel,
        out_shape=jax.ShapeDtypeStruct((B, Lq, d_model), q.dtype),
        grid=(B, n_q),
        in_specs=[
            pl.BlockSpec((1, tq, d_model), lambda b, i: (b, i, 0)),
            pl.BlockSpec((1, Lk, d_model), lambda b, i: (b, 0, 0)),
            pl.BlockSpec((1, Lk, d_model), lambda b, i: (b, 0, 0)),
            # TODO(synk): for very long keys also tile Lk (flash-style); on v7x
            # consider pipeline_mode=pl.Buffered(3) on the two time tensors.
            pl.BlockSpec((1, tq, Lk, d_model), lambda b, i: (b, i, 0, 0)),
            pl.BlockSpec((1, tq, Lk, d_model), lambda b, i: (b, i, 0, 0)),
            pl.BlockSpec((tq, Lk), lambda b, i: (i, 0)),
            pl.BlockSpec((1, 1, Lk), lambda b, i: (b, 0, 0)),
        ],
        out_specs=pl.BlockSpec((1, tq, d_model), lambda b, i: (b, i, 0)),
        scratch_shapes=[pltpu.VMEM((tq, d_model), jnp.float32)],
        compiler_params=pltpu.CompilerParams(
            dimension_semantics=("parallel", "parallel"),
            vmem_limit_bytes=vmem_limit),
        cost_estimate=cost,
    )(q, k, v, time_k, time_v, attn_mask, padding_mask)


# ----------------------------------------------------------------------------
# Full TimeAwareMultiHeadAttention forward (wrapper = glue only)
# ----------------------------------------------------------------------------
def time_aware_mha(params, Q, K, V, time_matrix_K, time_matrix_V,
                   padding_mask=None, attn_mask=None):
    """
    Q: [B, Lq, d_model], K/V: [B, Lk, d_model]
    time_matrix_K/V: [B, Lq, Lk, d_model]
    attn_mask: [Lq, Lk] (1 = keep), padding_mask: [B, Lk] (1 = pad), optional.
    returns: [B, Lq, d_model]
    """
    B, Lq, d_model = Q.shape
    Lk = K.shape[1]
    H = params["n_heads"]
    hd = d_model // H

    # Projections (tiled Pallas matmuls). Stay in [B, L, d_model] layout.
    q = linear(Q.reshape(B * Lq, d_model), params["wq"], params["bq"]).reshape(B, Lq, d_model)
    k = linear(K.reshape(B * Lk, d_model), params["wk"], params["bk"]).reshape(B, Lk, d_model)
    v = linear(V.reshape(B * Lk, d_model), params["wv"], params["bv"]).reshape(B, Lk, d_model)

    # HBM-bandwidth: feed the attention kernel bf16 time matrices (in a real
    # pipeline the time-interval embedding tables would be bf16 upstream).
    time_k = time_matrix_K.astype(jnp.bfloat16)
    time_v = time_matrix_V.astype(jnp.bfloat16)

    if attn_mask is None:
        attn_mask = jnp.ones((Lq, Lk), jnp.int32)
    if padding_mask is None:
        padding_mask = jnp.zeros((B, Lk), jnp.int32)

    x = tisas_attention(
        q, k, v, time_k, time_v,
        attn_mask.astype(jnp.int32),
        padding_mask.astype(jnp.int32).reshape(B, 1, Lk),
        n_heads=H, head_dim=hd)                      # [B, Lq, d_model]

    out = linear(x.reshape(B * Lq, d_model), params["wo"], params["bo"])
    return out.reshape(B, Lq, d_model)


# ----------------------------------------------------------------------------
# Parameter init (same shapes as nn.Linear(d_model, d_model), stored [Din, Dout])
# ----------------------------------------------------------------------------
def init_params(key, d_model, n_heads):
    bound = 1.0 / math.sqrt(d_model)
    ks = jax.random.split(key, 8)

    def lin(kw, kb):
        w = jax.random.uniform(kw, (d_model, d_model), jnp.float32, -bound, bound)
        b = jax.random.uniform(kb, (d_model,), jnp.float32, -bound, bound)
        return w, b

    wq, bq = lin(ks[0], ks[1])
    wk, bk = lin(ks[2], ks[3])
    wv, bv = lin(ks[4], ks[5])
    wo, bo = lin(ks[6], ks[7])
    return dict(wq=wq, bq=bq, wk=wk, bk=bk, wv=wv, bv=bv, wo=wo, bo=bo,
                n_heads=n_heads)


def reference_tisas_mha(params, Q, K, V, tK, tV, padding_mask=None, attn_mask=None):
    """Pure-JAX reference (f32 everywhere) for correctness check."""
    B, Lq, d_model = Q.shape
    Lk = K.shape[1]
    H = params["n_heads"]
    hd = d_model // H
    q = Q @ params["wq"] + params["bq"]
    k = K @ params["wk"] + params["bk"]
    v = V @ params["wv"] + params["bv"]
    q = q.reshape(B, Lq, H, hd).transpose(0, 2, 1, 3)
    k = k.reshape(B, Lk, H, hd).transpose(0, 2, 1, 3)
    v = v.reshape(B, Lk, H, hd).transpose(0, 2, 1, 3)
    tK_ = tK.reshape(B, Lq, Lk, H, hd).transpose(0, 3, 1, 2, 4)
    tV_ = tV.reshape(B, Lq, Lk, H, hd).transpose(0, 3, 1, 2, 4)
    s = jnp.einsum("bhqd,bhkd->bhqk", q, k)
    s = s + jnp.einsum("bhqd,bhqkd->bhqk", q, tK_)
    s = s / jnp.sqrt(hd)
    if attn_mask is not None:
        s = jnp.where(attn_mask[None, None] == 0, -1e9, s)
    if padding_mask is not None:
        s = jnp.where(padding_mask[:, None, None, :] != 0, -1e9, s)
    p = jax.nn.softmax(s, axis=-1)
    x = jnp.einsum("bhqk,bhkd->bhqd", p, v)
    x = x + jnp.einsum("bhqk,bhqkd->bhqd", p, tV_)
    x = x.transpose(0, 2, 1, 3).reshape(B, Lq, d_model)
    return x @ params["wo"] + params["bo"]


if __name__ == "__main__":
    B, Lq, Lk, d_model, n_heads = 2, 8, 8, 32, 4

    key = jax.random.PRNGKey(0)
    kp, kq, kk, kv, ktk, ktv = jax.random.split(key, 6)
    params = init_params(kp, d_model, n_heads)

    Q = jax.random.normal(kq, (B, Lq, d_model), jnp.float32)
    K = jax.random.normal(kk, (B, Lk, d_model), jnp.float32)
    V = jax.random.normal(kv, (B, Lk, d_model), jnp.float32)
    time_matrix_K = 0.1 * jax.random.normal(ktk, (B, Lq, Lk, d_model), jnp.float32)
    time_matrix_V = 0.1 * jax.random.normal(ktv, (B, Lq, Lk, d_model), jnp.float32)

    # causal attention mask [Lq, Lk] (1 = keep) and a padding mask [B, Lk] (1 = pad)
    attn_mask = jnp.tril(jnp.ones((Lq, Lk), jnp.int32))
    padding_mask = jnp.zeros((B, Lk), jnp.int32).at[:, -1].set(1)

    out = time_aware_mha(params, Q, K, V, time_matrix_K, time_matrix_V,
                         padding_mask, attn_mask)
    out = jax.block_until_ready(out)

    ref = reference_tisas_mha(params, Q, K, V, time_matrix_K, time_matrix_V,
                              padding_mask, attn_mask)
    assert out.shape == (B, Lq, d_model)
    # tolerance accounts for bf16 time matrices + approx reciprocal in softmax
    assert jnp.allclose(out, ref, atol=2e-2, rtol=2e-2), "mismatch vs pure-JAX reference"

    print("KERNEL_OK")
</pallas_src>

<mosaic_0001>
module attributes {stable_mosaic.version = 11 : i64} {
  func.func @_linear_kernel(%arg0: i32, %arg1: i32, %arg2: i32, %arg3: memref<16x32xf32, #tpu.memory_space<vmem>>, %arg4: memref<32x32xf32, #tpu.memory_space<vmem>>, %arg5: memref<1x32xf32, #tpu.memory_space<vmem>>, %arg6: memref<16x32xf32, #tpu.memory_space<vmem>>, %arg7: memref<16x32xf32, #tpu.memory_space<vmem>>) attributes {dimension_semantics = [#tpu.dimension_semantics<parallel>, #tpu.dimension_semantics<parallel>, #tpu.dimension_semantics<arbitrary>], iteration_bounds = array<i64: 1, 1, 1>, scalar_prefetch = 0 : i64, scratch_operands = 1 : i64, tpu.core_type = #tpu.core_type<tc>, window_params = [{transform_indices = @transform_0, window_bounds = array<i64: 16, 32>}, {transform_indices = @transform_1, window_bounds = array<i64: 32, 32>}, {transform_indices = @transform_2, window_bounds = array<i64: 1, 32>}, {transform_indices = @transform_3, window_bounds = array<i64: 16, 32>}]} {
    %c0_i32 = arith.constant 0 : i32
    %0 = arith.cmpi eq, %arg2, %c0_i32 : i32
    %1 = arith.extui %0 : i1 to i32
    %c0_i32_0 = arith.constant 0 : i32
    %2 = arith.cmpi ne, %1, %c0_i32_0 : i32
    scf.if %2 {
      %cst_10 = arith.constant 0.000000e+00 : f32
      %12 = vector.broadcast %cst_10 : f32 to vector<16x32xf32>
      %c0_11 = arith.constant 0 : index
      %c0_12 = arith.constant 0 : index
      %13 = vector.load %arg7[%c0_11, %c0_12] : memref<16x32xf32, #tpu.memory_space<vmem>>, vector<16x32xf32>
      tpu.vector_store %arg7[%c0_11, %c0_12], %12 {strides = array<i32>} : memref<16x32xf32, #tpu.memory_space<vmem>>, vector<16x32xf32>,
    } else {
    }
    %c0 = arith.constant 0 : index
    %c0_1 = arith.constant 0 : index
    %3 = vector.load %arg7[%c0, %c0_1] : memref<16x32xf32, #tpu.memory_space<vmem>>, vector<16x32xf32>
    %c0_2 = arith.constant 0 : index
    %c0_3 = arith.constant 0 : index
    %4 = vector.load %arg3[%c0_2, %c0_3] : memref<16x32xf32, #tpu.memory_space<vmem>>, vector<16x32xf32>
    %c0_4 = arith.constant 0 : index
    %c0_5 = arith.constant 0 : index
    %5 = vector.load %arg4[%c0_4, %c0_5] : memref<32x32xf32, #tpu.memory_space<vmem>>, vector<32x32xf32>
    %cst = arith.constant dense<0.000000e+00> : vector<16x32xf32>
    %6 = tpu.matmul %4, %5, %cst {dimension_numbers = #tpu.dot_dimension_numbers<[1], [0], [0], [1], [0, 0, 1, 1], [], []>} : vector<16x32xf32>, vector<32x32xf32>, vector<16x32xf32> -> vector<16x32xf32>
    %7 = arith.addf %3, %6 : vector<16x32xf32>
    %c0_6 = arith.constant 0 : index
    %c0_7 = arith.constant 0 : index
    %8 = vector.load %arg7[%c0_6, %c0_7] : memref<16x32xf32, #tpu.memory_space<vmem>>, vector<16x32xf32>
    tpu.vector_store %arg7[%c0_6, %c0_7], %7 {strides = array<i32>} : memref<16x32xf32, #tpu.memory_space<vmem>>, vector<16x32xf32>,
    %c0_i32_8 = arith.constant 0 : i32
    %9 = arith.cmpi eq, %arg2, %c0_i32_8 : i32
    %10 = arith.extui %9 : i1 to i32
    %c0_i32_9 = arith.constant 0 : i32
    %11 = arith.cmpi ne, %10, %c0_i32_9 : i32
    scf.if %11 {
      %c0_10 = arith.constant 0 : index
      %c0_11 = arith.constant 0 : index
      %12 = vector.load %arg7[%c0_10, %c0_11] : memref<16x32xf32, #tpu.memory_space<vmem>>, vector<16x32xf32>
      %c0_12 = arith.constant 0 : index
      %c0_13 = arith.constant 0 : index
      %13 = vector.load %arg5[%c0_12, %c0_13] : memref<1x32xf32, #tpu.memory_space<vmem>>, vector<1x32xf32>
      %14 = vector.broadcast %13 : vector<1x32xf32> to vector<16x32xf32>
      %15 = arith.addf %12, %14 : vector<16x32xf32>
      %c0_14 = arith.constant 0 : index
      %c0_15 = arith.constant 0 : index
      %16 = vector.load %arg6[%c0_14, %c0_15] : memref<16x32xf32, #tpu.memory_space<vmem>>, vector<16x32xf32>
      tpu.vector_store %arg6[%c0_14, %c0_15], %15 {strides = array<i32>} : memref<16x32xf32, #tpu.memory_space<vmem>>, vector<16x32xf32>,
    } else {
    }
    return
  }
  func.func @transform_0(%arg0: i32, %arg1: i32, %arg2: i32) -> (i32, i32) {
    %c0_i32 = arith.constant 0 : i32
    return %arg0, %arg2 : i32, i32
  }
  func.func @transform_1(%arg0: i32, %arg1: i32, %arg2: i32) -> (i32, i32) {
    %c0_i32 = arith.constant 0 : i32
    return %arg2, %arg1 : i32, i32
  }
  func.func @transform_2(%arg0: i32, %arg1: i32, %arg2: i32) -> (i32, i32) {
    %c0_i32 = arith.constant 0 : i32
    %c0_i32_0 = arith.constant 0 : i32
    return %c0_i32, %arg1 : i32, i32
  }
  func.func @transform_3(%arg0: i32, %arg1: i32, %arg2: i32) -> (i32, i32) {
    %c0_i32 = arith.constant 0 : i32
    return %arg0, %arg1 : i32, i32
  }
}

</mosaic_0001>

<llo_original>
// kernel: tpu_custom_call.1
$region0: #{tpu_custom_call.1}
  #allocation0 [shape = 'u32[]', space=smem, size = 0x4, offset = 0x4, fixed_abs, tag = 'smem constant byte address 0x4 - core index']
  #allocation1 [shape = 'u32[144,128]{1,0:T(1,128)}', space=vmem, size = 0x12000, scoped, tag = 'internal scratch']
  #allocation2 [shape = 'f32[16,32]{1,0:T(8,128)}', space=vmem, size = 0x2000, scoped, tag = 'scratch operand']
  %s0 = inlined_call_operand.hbm [shape: f32[16,32], index: 0, kind: input, shape index: {}]
  %s1 = inlined_call_operand.hbm [shape: f32[32,32], index: 1, kind: input, shape index: {}]
  %s2 = inlined_call_operand.vmem [shape: f32[1,32], index: 2, kind: input, shape index: {}]
  %s3 = inlined_call_operand.hbm [shape: f32[16,32], index: 3, kind: output, shape index: {}]
  %s4 = sld [smem:[#allocation0]]
  $region38: #{tpu_custom_call.1} parent=0
    _
  %s6 = ssub.s32 1, %s4
  %s7 = scalar_select 0, %s6, %s4
  $region1: #{tpu_custom_call.1} parent=0
    #allocation3 [shape = 'u8[8192]{0}', space=vmem, size = 0x2000, scoped, tag = 'input window, operand 0, single buffered']
    #allocation4 [shape = 's32[1]{0}', space=sflag, size = 0x4, scoped, tag = 'scoped memory for tpu_custom_call.1']
    #allocation5 [shape = 's32[1]{0}', space=sflag, size = 0x4, scoped, tag = 'scoped memory for tpu_custom_call.1']
    #allocation6 [shape = 'u8[16384]{0}', space=vmem, size = 0x4000, scoped, tag = 'input window, operand 1, single buffered']
    #allocation7 [shape = 's32[1]{0}', space=sflag, size = 0x4, scoped, tag = 'scoped memory for tpu_custom_call.1']
    #allocation8 [shape = 'u8[8192]{0}', space=vmem, size = 0x2000, scoped, tag = 'output window, operand 0, single buffered']
    %8 = vsyncpa [#allocation4], 0
    %9 = vsyncpa [#allocation7], 0
    %10 = vsyncpa [#allocation5], 0
    // Predicated region
    $region2: #{tpu_custom_call.1} parent=1 // pred_check
      _
    $region3: #{tpu_custom_call.1} parent=1 // pred_check_branch
      %12 = sbr.rel (0) target = $region5
    $region4: #{tpu_custom_call.1} parent=1 // pred_region
      %s14 = ssub.s32 256, 256
      %15 = vsyncadd [#allocation4], %s14
      %s16 = sshll.u32 [#allocation3], 4
      %s17 = int_to_ptr.vmem [resolvable:$true] %s16
      %22 = dma.hbm_to_vmem [thread:$0]  %s0, 256, %s17, [#allocation4], 128, 128, 8
    $region5: #{tpu_custom_call.1} parent=1 // pred_fallthru
      _
    // Predicated region
    $region6: #{tpu_custom_call.1} parent=1 // pred_check
      _
    $region7: #{tpu_custom_call.1} parent=1 // pred_check_branch
      %24 = sbr.rel (0) target = $region9
    $region8: #{tpu_custom_call.1} parent=1 // pred_region
      %s26 = ssub.s32 512, 512
      %27 = vsyncadd [#allocation7], %s26
      %s28 = sshll.u32 [#allocation6], 4
      %s29 = int_to_ptr.vmem [resolvable:$true] %s28
      %34 = dma.hbm_to_vmem [thread:$0]  %s1, 512, %s29, [#allocation7], 128, 128, 8
    $region9: #{tpu_custom_call.1} parent=1 // pred_fallthru
      _
    // Predicated region
    $region10: #{tpu_custom_call.1} parent=1 // pred_check
      _
    $region11: #{tpu_custom_call.1} parent=1 // pred_check_branch
      %36 = sbr.rel (0) target = $region13
    $region12: #{tpu_custom_call.1} parent=1 // pred_region
      _
    $region13: #{tpu_custom_call.1} parent=1 // pred_fallthru
      _
    // Predicated region
    $region14: #{tpu_custom_call.1} parent=1 // pred_check
      _
    $region15: #{tpu_custom_call.1} parent=1 // pred_check_branch
      %38 = sbr.rel (0) target = $region17
    $region16: #{tpu_custom_call.1} parent=1 // pred_region
      %39 = dma.done [#allocation4], 256
    $region17: #{tpu_custom_call.1} parent=1 // pred_fallthru
      _
    // Predicated region
    $region18: #{tpu_custom_call.1} parent=1 // pred_check
      _
    $region19: #{tpu_custom_call.1} parent=1 // pred_check_branch
      %41 = sbr.rel (0) target = $region21
    $region20: #{tpu_custom_call.1} parent=1 // pred_region
      %42 = dma.done [#allocation7], 512
    $region21: #{tpu_custom_call.1} parent=1 // pred_fallthru
      _
    %p43 = scmp.eq.s32.totalorder 0, 0
    // Predicated region
    $region22: #{tpu_custom_call.1} parent=1 // pred_check
      %p44 = pneg %p43
    $region23: #{tpu_custom_call.1} parent=1 // pred_check_branch
      %46 = sbr.rel (%p44) target = $region25
    $region24: #{tpu_custom_call.1} parent=1 // pred_region
      %vm47 = vcmask 261120
      %48 = vst.msk [vmem:[#allocation2] sm:$0xff] %vm47, 0.0
      %49 = vst.msk [vmem:[#allocation2 + $0x8] sm:$0xff] %vm47, 0.0
    $region25: #{tpu_custom_call.1} parent=1 // pred_fallthru
      _
    %v50 = vld [vmem:[#allocation2] sm:$0xff]
    %v51 = vld [vmem:[#allocation2 + $0x8] sm:$0xff]
    %v52 = vld [vmem:[#allocation3] sm:$0xff]
    %v53 = vld [vmem:[#allocation3 + $0x8] sm:$0xff]
    %v54 = vld [vmem:[#allocation6] sm:$0xff]
    %v55 = vld [vmem:[#allocation6 + $0x8] sm:$0xff]
    %v56 = vld [vmem:[#allocation6 + $0x10] sm:$0xff]
    %v57 = vld [vmem:[#allocation6 + $0x18] sm:$0xff]
    %vm58 = vcmask 261120
    %v60 = vsel %vm58, %v52, 0
    %v63 = vsel %vm58, %v53, 0
    %65 = vmatprep.subr.mxu0 0.0
    %66 = vmatpush1.msra.mxu0 0.0
    %67 = vmatprep.subr.mxu0 0.0
    %68 = vmatpush1.msra.mxu0 0.0
    %69 = vmatprep.subr.mxu0 0.0
    %70 = vmatpush1.msra.mxu0 0.0
    %71 = vmatprep.subr.mxu0 0.0
    %72 = vmatpush1.msra.mxu0 0.0
    %73 = vmatprep.subr.mxu0 0.0
    %74 = vmatpush1.msra.mxu0 0.0
    %75 = vmatprep.subr.mxu0 0.0
    %76 = vmatpush1.msra.mxu0 0.0
    %77 = vmatprep.subr.mxu0 0.0
    %78 = vmatpush1.msra.mxu0 0.0
    %79 = vmatprep.subr.mxu0 0.0
    %80 = vmatpush1.msra.mxu0 0.0
    %81 = vmatprep.subr.mxu0 0.0
    %82 = vmatpush1.msra.mxu0 0.0
    %83 = vmatprep.subr.mxu0 0.0
    %84 = vmatpush1.msra.mxu0 0.0
    %85 = vmatprep.subr.mxu0 0.0
    %86 = vmatpush1.msra.mxu0 0.0
    %87 = vmatprep.subr.mxu0 0.0
    %88 = vmatpush1.msra.mxu0 0.0
    %89 = vmatprep.subr.mxu0 0.0
    %90 = vmatpush1.msra.mxu0 %v57
    %91 = vmatprep.subr.mxu0 0.0
    %92 = vmatpush1.msra.mxu0 %v56
    %93 = vmatprep.subr.mxu0 0.0
    %94 = vmatpush1.msra.mxu0 %v55
    %95 = vmatprep.subr.mxu0 0.0
    %96 = vmatpush1.msra.mxu0 %v54
    %97 = vmatprep.subr.mxu0 0.0
    %98 = vmatpush2.msra.mxu0 0.0
    %99 = vmatprep.subr.mxu0 0.0
    %100 = vmatpush2.msra.mxu0 0.0
    %101 = vmatprep.subr.mxu0 0.0
    %102 = vmatpush2.msra.mxu0 0.0
    %103 = vmatprep.subr.mxu0 0.0
    %104 = vmatpush2.msra.mxu0 0.0
    %105 = vmatprep.subr.mxu0 0.0
    %106 = vmatpush2.msra.mxu0 0.0
    %107 = vmatprep.subr.mxu0 0.0
    %108 = vmatpush2.msra.mxu0 0.0
    %109 = vmatprep.subr.mxu0 0.0
    %110 = vmatpush2.msra.mxu0 0.0
    %111 = vmatprep.subr.mxu0 0.0
    %112 = vmatpush2.msra.mxu0 0.0
    %113 = vmatprep.subr.mxu0 0.0
    %114 = vmatpush2.msra.mxu0 0.0
    %115 = vmatprep.subr.mxu0 0.0
    %116 = vmatpush2.msra.mxu0 0.0
    %117 = vmatprep.subr.mxu0 0.0
    %118 = vmatpush2.msra.mxu0 0.0
    %119 = vmatprep.subr.mxu0 0.0
    %120 = vmatpush2.msra.mxu0 0.0
    %121 = vmatprep.subr.mxu0 0.0
    %122 = vmatpush2.msra.mxu0 0.0
    %123 = vmatprep.subr.mxu0 0.0
    %124 = vmatpush2.msra.mxu0 0.0
    %125 = vmatprep.subr.mxu0 0.0
    %126 = vmatpush2.msra.mxu0 0.0
    %127 = vmatprep.subr.mxu0 0.0
    %128 = vmatpush2.msra.mxu0 0.0
    %129 = vmatprep.mubr.f32.mxu0 0.0
    %130 = vmatmul.mubr.f32.gmra.mxu0 %v60
    %v131 = vpop.f32.mrf.mxu0
    %v132 = vadd.f32 0.0, %v131
    %v133 = vpop.f32.mrf.mxu0
    %134 = vmatprep.mubr.f32.mxu0 0.0
    %135 = vmatmul.mubr.f32.gmra.mxu0 %v63
    %v136 = vpop.f32.mrf.mxu0
    %v137 = vadd.f32 0.0, %v136
    %v138 = vpop.f32.mrf.mxu0
    %139 = vdwg.mxu0
    %v140 = vadd.f32 %v50, %v132
    %v141 = vadd.f32 %v51, %v137
    %142 = vst.msk [vmem:[#allocation2] sm:$0xff] %vm58, %v140
    %143 = vst.msk [vmem:[#allocation2 + $0x8] sm:$0xff] %vm58, %v141
    // Predicated region
    $region26: #{tpu_custom_call.1} parent=1 // pred_check
      %p144 = pneg %p43
    $region27: #{tpu_custom_call.1} parent=1 // pred_check_branch
      %146 = sbr.rel (%p144) target = $region29
    $region28: #{tpu_custom_call.1} parent=1 // pred_region
      %v147 = vld [vmem:[#allocation2] sm:$0xff]
      %v148 = vld [vmem:[#allocation2 + $0x8] sm:$0xff]
      %v149 = vld [vmem:[%s2] sm:$0x1]
      %v151 = vlaneseq
      %v152 = vshrl.u32 %v151, 7
      %v153 = vsub.s32 0, %v152
      %v154 = vrot.slane %v149, %v153
      %v156 = vadd.f32 %v147, %v154
      %v157 = vadd.f32 %v148, %v154
      %158 = vst.msk [vmem:[#allocation8] sm:$0xff] %vm58, %v156
      %159 = vst.msk [vmem:[#allocation8 + $0x8] sm:$0xff] %vm58, %v157
    $region29: #{tpu_custom_call.1} parent=1 // pred_fallthru
      _
    // Predicated region
    $region30: #{tpu_custom_call.1} parent=1 // pred_check
      _
    $region31: #{tpu_custom_call.1} parent=1 // pred_check_branch
      %161 = sbr.rel (0) target = $region33
    $region32: #{tpu_custom_call.1} parent=1 // pred_region
      %s163 = ssub.s32 256, 256
      %164 = vsyncadd [#allocation5], %s163
      %s165 = sshll.u32 [#allocation8], 4
      %s166 = int_to_ptr.vmem [resolvable:$true] %s165
      %171 = dma.vmem_to_hbm [thread:$0]  %s166, 256, %s3, [#allocation5], 128, 128, 8
    $region33: #{tpu_custom_call.1} parent=1 // pred_fallthru
      _
    // Predicated region
    $region34: #{tpu_custom_call.1} parent=1 // pred_check
      _
    $region35: #{tpu_custom_call.1} parent=1 // pred_check_branch
      %173 = sbr.rel (0) target = $region37
    $region36: #{tpu_custom_call.1} parent=1 // pred_region
      %174 = dma.done [#allocation5], 256
    $region37: #{tpu_custom_call.1} parent=1 // pred_fallthru
      _
    %175 = vsyncpa [#allocation4], 1
    %176 = vsyncpa [#allocation7], 1
    %177 = vsyncpa [#allocation5], 1

</llo_original>
